<compile_context>
chip_gen: v6e
topology: v6e:2x2x1
jax: 0.10.0
libtpu: 0.0.40
codegen_flags: <defaults>
</compile_context>

<pallas_src>
import jax
import jax.numpy as jnp
from jax.experimental import pallas as pl
from jax.experimental.pallas import tpu as pltpu


def _se_kernel(x_ref, w1_ref, w2_ref, o_ref):
    # ---- Squeeze: AdaptiveMaxPool1d(1) == max over the length axis ----------
    y = jnp.max(x_ref[...], axis=-1)                                   # (TB, C)

    # ---- Excite: Linear -> ReLU -> Linear -> Sigmoid (f32 accumulation) -----
    h = jnp.dot(y, w1_ref[...], preferred_element_type=jnp.float32)    # (TB, C//r)
    h = jnp.maximum(h, 0.0)
    s = jnp.dot(h, w2_ref[...], preferred_element_type=jnp.float32)    # (TB, C)
    gate = jax.nn.sigmoid(s).astype(o_ref.dtype)                       # (TB, C)

    # ---- Scale: broadcast the per-(batch, channel) gate over L --------------
    # Re-read x from the VMEM block instead of keeping the full (TB, C, L)
    # value live across the squeeze/excite computation.
    o_ref[...] = (x_ref[...] * gate[:, :, None]).astype(o_ref.dtype)


def _vmem_capacity_bytes():
    """Best-effort per-TensorCore VMEM size; conservative (v7x) fallback."""
    try:
        info = pltpu.get_tpu_info()
        for attr in ("vmem_capacity_bytes", "vmem_bytes", "vmem_capacity"):
            val = getattr(info, attr, None)
            if val:
                return int(val)
    except Exception:
        pass
    return 64 << 20


def _choose_tiling(batch, per_batch_bytes):
    """Pick batch-rows-per-block, grid steps and a VMEM cap per generation."""
    vmem = _vmem_capacity_bytes()
    if vmem >= (100 << 20):
        # v5e / v6e: 128 MiB VMEM, single TensorCore -> go big, keep >=2 steps.
        target_block_bytes = 16 << 20
        vmem_cap = 100 << 20
        min_steps = 2
        even_steps = False
    else:
        # v7x-class: 64 MiB VMEM per TC, 2 TCs -> leave headroom, >=2 steps/TC.
        target_block_bytes = 5 << 20
        vmem_cap = 48 << 20
        min_steps = 4
        even_steps = True

    tb = max(1, min(batch, target_block_bytes // max(1, per_batch_bytes)))
    steps = pl.cdiv(batch, tb)
    if steps < min_steps <= batch:
        steps = min_steps
    if even_steps and (steps % 2) and steps < batch:
        steps += 1
    tb = pl.cdiv(batch, steps)          # only ever shrinks tb
    steps = pl.cdiv(batch, tb)
    return tb, steps, vmem_cap


def se_layer(x, w1, w2):
    """Squeeze-and-excite.  x: (B, C, L); w1: (C, C//r); w2: (C//r, C)."""
    B, C, L = x.shape
    Cr = w1.shape[1]
    assert w1.shape == (C, Cr) and w2.shape == (Cr, C)

    per_batch_bytes = C * L * x.dtype.itemsize
    tb, steps, vmem_cap = _choose_tiling(B, per_batch_bytes)

    block_bytes = tb * per_batch_bytes
    w_bytes = w1.size * w1.dtype.itemsize + w2.size * w2.dtype.itemsize
    # Double-buffered input + output blocks, both weights, plus headroom.
    needed = 4 * block_bytes + 2 * w_bytes + (4 << 20)
    vmem_limit = int(max(32 << 20, min(vmem_cap, needed)))
    if needed > vmem_limit:   # huge single-row blocks: request what we need
        vmem_limit = int(needed)

    cost = pl.CostEstimate(
        flops=int(2 * B * C * Cr * 2 + B * C * L),
        transcendentals=int(B * C),
        bytes_accessed=int(2 * B * C * L * x.dtype.itemsize + w_bytes),
    )

    return pl.pallas_call(
        _se_kernel,
        out_shape=jax.ShapeDtypeStruct((B, C, L), x.dtype),
        grid=(steps,),
        in_specs=[
            pl.BlockSpec((tb, C, L), lambda b: (b, 0, 0)),   # tb batch rows of x
            pl.BlockSpec((C, Cr), lambda b: (0, 0)),         # full W1 (tiny)
            pl.BlockSpec((Cr, C), lambda b: (0, 0)),         # full W2 (tiny)
        ],
        out_specs=pl.BlockSpec((tb, C, L), lambda b: (b, 0, 0)),
        compiler_params=pltpu.CompilerParams(
            dimension_semantics=("parallel",),
            vmem_limit_bytes=vmem_limit,
        ),
        cost_estimate=cost,
    )(x, w1, w2)


def se_layer_ref(x, w1, w2):
    y = jnp.max(x, axis=-1)                       # AdaptiveMaxPool1d(1)
    h = jnp.maximum(jnp.dot(y, w1), 0.0)          # Linear (no bias) + ReLU
    s = jax.nn.sigmoid(jnp.dot(h, w2))            # Linear (no bias) + Sigmoid
    return x * s[:, :, None]


if __name__ == "__main__":
    # Small but representative shapes: reduction=16 divides C, L is a multiple
    # of 128 (lane-dense stores), B gives a few grid steps.
    B, C, L, reduction = 4, 64, 128, 16
    Cr = C // reduction

    key = jax.random.PRNGKey(0)
    kx, k1, k2 = jax.random.split(key, 3)
    x = jax.random.normal(kx, (B, C, L), dtype=jnp.float32)
    # PyTorch Linear stores (out, in); keep the transposed (in, out) layout so
    # the kernel computes y @ W directly.
    w1 = jax.random.normal(k1, (C, Cr), dtype=jnp.float32) * 0.1
    w2 = jax.random.normal(k2, (Cr, C), dtype=jnp.float32) * 0.1

    # --- f32 correctness check (matches the PyTorch module's dtype) ----------
    out = se_layer(x, w1, w2)
    jax.block_until_ready(out)
    ref = se_layer_ref(x, w1, w2)
    assert out.shape == (B, C, L)
    assert jnp.allclose(out, ref, atol=1e-4, rtol=1e-4), float(
        jnp.max(jnp.abs(out - ref)))

    # --- bf16 run: halves HBM traffic; kernel still accumulates in f32 -------
    xb, w1b, w2b = (a.astype(jnp.bfloat16) for a in (x, w1, w2))
    out_bf16 = se_layer(xb, w1b, w2b)
    jax.block_until_ready(out_bf16)
    ref_bf16 = se_layer_ref(xb.astype(jnp.float32), w1b.astype(jnp.float32),
                            w2b.astype(jnp.float32))
    assert out_bf16.dtype == jnp.bfloat16
    assert jnp.allclose(out_bf16.astype(jnp.float32), ref_bf16,
                        atol=5e-2, rtol=5e-2)

    print("KERNEL_OK")
</pallas_src>

<mosaic_0001>
module attributes {stable_mosaic.version = 11 : i64} {
  func.func @_se_kernel(%arg0: i32, %arg1: memref<1x64x128xf32, #tpu.memory_space<vmem>>, %arg2: memref<64x4xf32, #tpu.memory_space<vmem>>, %arg3: memref<4x64xf32, #tpu.memory_space<vmem>>, %arg4: memref<1x64x128xf32, #tpu.memory_space<vmem>>) attributes {dimension_semantics = [#tpu.dimension_semantics<parallel>], iteration_bounds = array<i64: 4>, scalar_prefetch = 0 : i64, scratch_operands = 0 : i64, tpu.core_type = #tpu.core_type<tc>, window_params = [{transform_indices = @transform_0, window_bounds = array<i64: 1, 64, 128>}, {pipeline_mode = #tpu.pipeline_mode<synchronous>, transform_indices = @transform_1, window_bounds = array<i64: 64, 4>}, {pipeline_mode = #tpu.pipeline_mode<synchronous>, transform_indices = @transform_2, window_bounds = array<i64: 4, 64>}, {transform_indices = @transform_3, window_bounds = array<i64: 1, 64, 128>}]} {
    %c0 = arith.constant 0 : index
    %c0_0 = arith.constant 0 : index
    %c0_1 = arith.constant 0 : index
    %0 = vector.load %arg1[%c0, %c0_0, %c0_1] : memref<1x64x128xf32, #tpu.memory_space<vmem>>, vector<1x64x128xf32>
    %cst = arith.constant dense<0xFF800000> : vector<1x64xf32>
    %1 = vector.multi_reduction <maximumf>, %0, %cst [2] : vector<1x64x128xf32> to vector<1x64xf32>
    %c0_2 = arith.constant 0 : index
    %c0_3 = arith.constant 0 : index
    %2 = vector.load %arg2[%c0_2, %c0_3] : memref<64x4xf32, #tpu.memory_space<vmem>>, vector<64x4xf32>
    %cst_4 = arith.constant dense<0.000000e+00> : vector<1x4xf32>
    %3 = tpu.matmul %1, %2, %cst_4 {dimension_numbers = #tpu.dot_dimension_numbers<[1], [0], [0], [1], [0, 0, 1, 1], [], []>} : vector<1x64xf32>, vector<64x4xf32>, vector<1x4xf32> -> vector<1x4xf32>
    %cst_5 = arith.constant 0.000000e+00 : f32
    %4 = vector.broadcast %cst_5 : f32 to vector<1x4xf32>
    %5 = arith.maximumf %3, %4 : vector<1x4xf32>
    %c0_6 = arith.constant 0 : index
    %c0_7 = arith.constant 0 : index
    %6 = vector.load %arg3[%c0_6, %c0_7] : memref<4x64xf32, #tpu.memory_space<vmem>>, vector<4x64xf32>
    %cst_8 = arith.constant dense<0.000000e+00> : vector<1x64xf32>
    %7 = tpu.matmul %5, %6, %cst_8 {dimension_numbers = #tpu.dot_dimension_numbers<[1], [0], [0], [1], [0, 0, 1, 1], [], []>} : vector<1x4xf32>, vector<4x64xf32>, vector<1x64xf32> -> vector<1x64xf32>
    %8 = arith.negf %7 : vector<1x64xf32>
    %9 = math.exp %8 : vector<1x64xf32>
    %cst_9 = arith.constant 1.000000e+00 : f32
    %10 = vector.broadcast %cst_9 : f32 to vector<1x64xf32>
    %11 = arith.addf %10, %9 : vector<1x64xf32>
    %12 = arith.divf %10, %11 : vector<1x64xf32>
    %c0_10 = arith.constant 0 : index
    %c0_11 = arith.constant 0 : index
    %c0_12 = arith.constant 0 : index
    %13 = vector.load %arg1[%c0_10, %c0_11, %c0_12] : memref<1x64x128xf32, #tpu.memory_space<vmem>>, vector<1x64x128xf32>
    %14 = vector.shape_cast %12 : vector<1x64xf32> to vector<1x64x1xf32>
    %15 = vector.broadcast %14 : vector<1x64x1xf32> to vector<1x64x128xf32>
    %16 = arith.mulf %13, %15 : vector<1x64x128xf32>
    %c0_13 = arith.constant 0 : index
    %c0_14 = arith.constant 0 : index
    %c0_15 = arith.constant 0 : index
    %17 = vector.load %arg4[%c0_13, %c0_14, %c0_15] : memref<1x64x128xf32, #tpu.memory_space<vmem>>, vector<1x64x128xf32>
    tpu.vector_store %arg4[%c0_13, %c0_14, %c0_15], %16 {strides = array<i32>} : memref<1x64x128xf32, #tpu.memory_space<vmem>>, vector<1x64x128xf32>,
    return
  }
  func.func @transform_0(%arg0: i32) -> (i32, i32, i32) {
    %c0_i32 = arith.constant 0 : i32
    %c0_i32_0 = arith.constant 0 : i32
    %c0_i32_1 = arith.constant 0 : i32
    return %arg0, %c0_i32, %c0_i32_0 : i32, i32, i32
  }
  func.func @transform_1(%arg0: i32) -> (i32, i32) {
    %c0_i32 = arith.constant 0 : i32
    %c0_i32_0 = arith.constant 0 : i32
    %c0_i32_1 = arith.constant 0 : i32
    return %c0_i32, %c0_i32_0 : i32, i32
  }
  func.func @transform_2(%arg0: i32) -> (i32, i32) {
    %c0_i32 = arith.constant 0 : i32
    %c0_i32_0 = arith.constant 0 : i32
    %c0_i32_1 = arith.constant 0 : i32
    return %c0_i32, %c0_i32_0 : i32, i32
  }
  func.func @transform_3(%arg0: i32) -> (i32, i32, i32) {
    %c0_i32 = arith.constant 0 : i32
    %c0_i32_0 = arith.constant 0 : i32
    %c0_i32_1 = arith.constant 0 : i32
    return %arg0, %c0_i32, %c0_i32_0 : i32, i32, i32
  }
}

</mosaic_0001>

<llo_original>
// kernel: tpu_custom_call.1
$region0: #{tpu_custom_call.1}
  #allocation0 [shape = 'u32[]', space=smem, size = 0x4, offset = 0x4, fixed_abs, tag = 'smem constant byte address 0x4 - core index']
  #allocation1 [shape = 'u32[144,128]{1,0:T(1,128)}', space=vmem, size = 0x12000, scoped, tag = 'internal scratch']
  %s0 = inlined_call_operand.hbm [shape: f32[4,64,128], index: 0, kind: input, shape index: {}]
  %s1 = inlined_call_operand.vmem [shape: f32[64,4], index: 1, kind: input, shape index: {}]
  %s2 = inlined_call_operand.vmem [shape: f32[4,64], index: 2, kind: input, shape index: {}]
  %s3 = inlined_call_operand.hbm [shape: f32[4,64,128], index: 3, kind: output, shape index: {}]
  %s4 = sld [smem:[#allocation0]]
  $region49: #{tpu_custom_call.1} parent=0
    _
  %s6 = ssub.s32 1, %s4
  %s7 = scalar_select 0, %s6, %s4
  $region1: #{tpu_custom_call.1} parent=0
    #allocation2 [shape = 'u8[65536]{0}', space=vmem, size = 0x10000, scoped, tag = 'input window, operand 0']
    #allocation3 [shape = 's32[2]{0}', space=sflag, size = 0x8, scoped, tag = 'scoped memory for tpu_custom_call.1']
    #allocation4 [shape = 's32[2]{0}', space=sflag, size = 0x8, scoped, tag = 'scoped memory for tpu_custom_call.1']
    #allocation5 [shape = 'u8[65536]{0}', space=vmem, size = 0x10000, scoped, tag = 'output window, operand 0']
    %8 = vsyncpa [#allocation3], 0
    %s9 = scalar_lea.sflag [#allocation3], 1
    %10 = vsyncpa %s9, 0
    %11 = vsyncpa [#allocation4], 0
    %s12 = scalar_lea.sflag [#allocation4], 1
    %13 = vsyncpa %s12, 0
    loop: start=0, step=1, limit=6
    $region2: #{tpu_custom_call.1} parent=1 // loop_pre_header
      _
    $region3: #{tpu_custom_call.1} parent=1 // loop_header
      %s15 = sphi 0, %s19
      %p16 = scmp.ge.s32.totalorder %s15, 6
      %s25 = sphi 0, %s27
      %s28 = sphi 0, %s25
      %s29 = sphi 0, %s28
      %s45 = sphi 0, %s29
      %s49 = sphi 0, %s49
      %s51 = sphi 0, %s49
      %s52 = sphi 0, %s51
      %s66 = sphi 0, %s52
      %s70 = sphi 0, %s70
      %s72 = sphi 0, %s70
      %s73 = sphi 0, %s72
      %s87 = sphi 0, %s73
      %s93 = sphi 0, %s95
      %s96 = sphi 0, %s93
      %s97 = sphi 0, %s96
      %s113 = sphi 0, %s97
    $region4: #{tpu_custom_call.1} parent=1 // loop_header_branch
      %18 = sbr.rel (%p16) target = $region8
    $region5: #{tpu_custom_call.1} parent=1 // loop_body
      %s20 = ssub.s32 %s15, 1
      %s21 = ssub.s32 %s15, 2
      %s22 = sadd.s32 %s15, 1
      %s23 = ssub.s32 %s15, %s22
      %p24 = scmp.eq.s32.totalorder %s23, 0
      %s26 = sadd.s32 %s25, 1
      %s27 = scalar_select %p24, %s25, %s26
      %p30 = pneg %p24
      %p31 = scmp.eq.s32.totalorder %s15, 3
      %p32 = por %p30, %p31
      %p33 = scmp.ne.s32.totalorder %s25, %s28
      %p34 = scmp.eq.s32.totalorder %s15, 0
      %p35 = por %p33, %p34
      %p36 = scmp.ne.s32.totalorder %s25, %s28
      %p37 = scmp.eq.s32.totalorder %s20, 3
      %p38 = por %p36, %p37
      %p39 = scmp.ne.s32.totalorder %s28, %s29
      %p40 = scmp.eq.s32.totalorder %s20, 0
      %p41 = por %p39, %p40
      %p42 = scmp.ne.s32.totalorder %s28, %s29
      %p43 = scmp.eq.s32.totalorder %s21, 3
      %p44 = por %p42, %p43
      %p46 = scmp.ne.s32.totalorder %s29, %s45
      %p47 = scmp.eq.s32.totalorder %s21, 0
      %p48 = por %p46, %p47
      %s50 = sadd.s32 %s49, 1
      %p53 = scmp.eq.s32.totalorder %s15, 3
      %p54 = scmp.ne.s32.totalorder %s49, %s51
      %p55 = scmp.eq.s32.totalorder %s15, 0
      %p56 = por %p54, %p55
      %p57 = scmp.ne.s32.totalorder %s49, %s51
      %p58 = scmp.eq.s32.totalorder %s20, 3
      %p59 = por %p57, %p58
      %p60 = scmp.ne.s32.totalorder %s51, %s52
      %p61 = scmp.eq.s32.totalorder %s20, 0
      %p62 = por %p60, %p61
      %p63 = scmp.ne.s32.totalorder %s51, %s52
      %p64 = scmp.eq.s32.totalorder %s21, 3
      %p65 = por %p63, %p64
      %p67 = scmp.ne.s32.totalorder %s52, %s66
      %p68 = scmp.eq.s32.totalorder %s21, 0
      %p69 = por %p67, %p68
      %s71 = sadd.s32 %s70, 1
      %p74 = scmp.eq.s32.totalorder %s15, 3
      %p75 = scmp.ne.s32.totalorder %s70, %s72
      %p76 = scmp.eq.s32.totalorder %s15, 0
      %p77 = por %p75, %p76
      %p78 = scmp.ne.s32.totalorder %s70, %s72
      %p79 = scmp.eq.s32.totalorder %s20, 3
      %p80 = por %p78, %p79
      %p81 = scmp.ne.s32.totalorder %s72, %s73
      %p82 = scmp.eq.s32.totalorder %s20, 0
      %p83 = por %p81, %p82
      %p84 = scmp.ne.s32.totalorder %s72, %s73
      %p85 = scmp.eq.s32.totalorder %s21, 3
      %p86 = por %p84, %p85
      %p88 = scmp.ne.s32.totalorder %s73, %s87
      %p89 = scmp.eq.s32.totalorder %s21, 0
      %p90 = por %p88, %p89
      %s91 = ssub.s32 %s15, %s22
      %p92 = scmp.eq.s32.totalorder %s91, 0
      %s94 = sadd.s32 %s93, 1
      %s95 = scalar_select %p92, %s93, %s94
      %p98 = pneg %p92
      %p99 = scmp.eq.s32.totalorder %s15, 3
      %p100 = por %p98, %p99
      %p101 = scmp.ne.s32.totalorder %s93, %s96
      %p102 = scmp.eq.s32.totalorder %s15, 0
      %p103 = por %p101, %p102
      %p104 = scmp.ne.s32.totalorder %s93, %s96
      %p105 = scmp.eq.s32.totalorder %s20, 3
      %p106 = por %p104, %p105
      %p107 = scmp.ne.s32.totalorder %s96, %s97
      %p108 = scmp.eq.s32.totalorder %s20, 0
      %p109 = por %p107, %p108
      %p110 = scmp.ne.s32.totalorder %s96, %s97
      %p111 = scmp.eq.s32.totalorder %s21, 3
      %p112 = por %p110, %p111
      %p114 = scmp.ne.s32.totalorder %s97, %s113
      %p115 = scmp.eq.s32.totalorder %s21, 0
      %p116 = por %p114, %p115
      %p117 = scmp.le.s32.totalorder 1, %s15
      %p118 = scmp.lt.s32.totalorder %s15, 5
      %p119 = pnand %p117, %p118
      %p120 = pneg %p119
      // Predicated region
      $region9: #{tpu_custom_call.1} parent=5 // pred_check
        _
      $region10: #{tpu_custom_call.1} parent=5 // pred_check_branch
        %122 = sbr.rel (%p119) target = $region12
      $region11: #{tpu_custom_call.1} parent=5 // pred_region
        %s123 = ssub.s32 %s15, 1
        // Predicated region
        $region13: #{tpu_custom_call.1} parent=11 // pred_check
          %p124 = pneg %p62
        $region14: #{tpu_custom_call.1} parent=11 // pred_check_branch
          %126 = sbr.rel (%p124) target = $region16
        $region15: #{tpu_custom_call.1} parent=11 // pred_region
          _
        $region16: #{tpu_custom_call.1} parent=11 // pred_fallthru
          _
        // Predicated region
        $region17: #{tpu_custom_call.1} parent=11 // pred_check
          %p127 = pneg %p83
        $region18: #{tpu_custom_call.1} parent=11 // pred_check_branch
          %129 = sbr.rel (%p127) target = $region20
        $region19: #{tpu_custom_call.1} parent=11 // pred_region
          _
        $region20: #{tpu_custom_call.1} parent=11 // pred_fallthru
          _
      $region12: #{tpu_custom_call.1} parent=5 // pred_fallthru
        _
      %p130 = scmp.lt.s32.totalorder %s15, 4
      // Predicated region
      $region21: #{tpu_custom_call.1} parent=5 // pred_check
        %p131 = pneg %p130
      $region22: #{tpu_custom_call.1} parent=5 // pred_check_branch
        %133 = sbr.rel (%p131) target = $region24
      $region23: #{tpu_custom_call.1} parent=5 // pred_region
        // Predicated region
        $region25: #{tpu_custom_call.1} parent=23 // pred_check
          %p134 = pneg %p35
        $region26: #{tpu_custom_call.1} parent=23 // pred_check_branch
          %136 = sbr.rel (%p134) target = $region28
        $region27: #{tpu_custom_call.1} parent=23 // pred_region
          %s137 = sand.u32 %s25, 1
          %s138 = scalar_lea.sflag [#allocation3], %s137
          %s139 = sand.u32 %s25, 1
          %s140 = smul.addr %s139, 64
          %s141 = scalar_lea.vmem [#allocation2], %s140
          %s143 = ssub.s32 1024, 1024
          %144 = vsyncadd %s138, %s143
          %s145 = smul.addr %s15, 8
          %s146 = smul.addr %s145, 128
          %s147 = scalar_lea.hbm %s0, %s146
          %s148 = sshll.u32 %s141, 4
          %s149 = int_to_ptr.vmem [resolvable:$true] %s148
          %154 = dma.hbm_to_vmem [thread:$0]  %s147, 1024, %s149, %s138, 128, 128, 8
        $region28: #{tpu_custom_call.1} parent=23 // pred_fallthru
          _
      $region24: #{tpu_custom_call.1} parent=5 // pred_fallthru
        _
      %p155 = scmp.le.s32.totalorder 1, %s15
      %p156 = scmp.lt.s32.totalorder %s15, 5
      %p157 = pnand %p155, %p156
      %p158 = pneg %p157
      // Predicated region
      $region29: #{tpu_custom_call.1} parent=5 // pred_check
        _
      $region30: #{tpu_custom_call.1} parent=5 // pred_check_branch
        %160 = sbr.rel (%p157) target = $region32
      $region31: #{tpu_custom_call.1} parent=5 // pred_region
        %s161 = ssub.s32 %s15, 1
        %s162 = sand.u32 %s28, 1
        %s163 = scalar_lea.sflag [#allocation3], %s162
        %s164 = sand.u32 %s28, 1
        %s165 = smul.addr %s164, 64
        %s166 = scalar_lea.vmem [#allocation2], %s165
        // Predicated region
        $region33: #{tpu_custom_call.1} parent=31 // pred_check
          %p167 = pneg %p41
        $region34: #{tpu_custom_call.1} parent=31 // pred_check_branch
          %169 = sbr.rel (%p167) target = $region36
        $region35: #{tpu_custom_call.1} parent=31 // pred_region
          %170 = dma.done %s163, 1024
        $region36: #{tpu_custom_call.1} parent=31 // pred_fallthru
          _
        %s171 = sand.u32 %s28, 1
        %s172 = scalar_lea.sflag [#allocation3], %s171
        %s173 = sand.u32 %s28, 1
        %s174 = smul.addr %s173, 64
        %s175 = scalar_lea.vmem [#allocation2], %s174
        %p176 = pneg %p41
        %p177 = pneg %p38
        %p178 = pneg %p62
        %p179 = pneg %p59
        %p180 = pneg %p83
        %p181 = pneg %p80
        %p182 = pneg %p109
        %p183 = pneg %p106
        %s184 = sand.u32 %s96, 1
        %s185 = scalar_lea.sflag [#allocation4], %s184
        %s186 = sand.u32 %s96, 1
        %s187 = smul.addr %s186, 64
        %s188 = scalar_lea.vmem [#allocation5], %s187
        %v189 = vld [vmem:[%s166] sm:$0xff]
        %v190 = vld [vmem:[%s166 + $0x8] sm:$0xff]
        %v191 = vld [vmem:[%s166 + $0x10] sm:$0xff]
        %v192 = vld [vmem:[%s166 + $0x18] sm:$0xff]
        %v193 = vld [vmem:[%s166 + $0x20] sm:$0xff]
        %v194 = vld [vmem:[%s166 + $0x28] sm:$0xff]
        %v195 = vld [vmem:[%s166 + $0x30] sm:$0xff]
        %v196 = vld [vmem:[%s166 + $0x38] sm:$0xff]
        %197 = vmax.xlane.f32.xlu0 %v189
        %v198 = vpop.xlane.xlu0 %197
        %199 = vmax.xlane.f32.xlu0 %v190
        %v200 = vpop.xlane.xlu0 %199
        %201 = vmax.xlane.f32.xlu0 %v191
        %v202 = vpop.xlane.xlu0 %201
        %203 = vmax.xlane.f32.xlu0 %v192
        %v204 = vpop.xlane.xlu0 %203
        %205 = vmax.xlane.f32.xlu0 %v193
        %v206 = vpop.xlane.xlu0 %205
        %207 = vmax.xlane.f32.xlu0 %v194
        %v208 = vpop.xlane.xlu0 %207
        %209 = vmax.xlane.f32.xlu0 %v195
        %v210 = vpop.xlane.xlu0 %209
        %211 = vmax.xlane.f32.xlu0 %v196
        %v212 = vpop.xlane.xlu0 %211
        %v213 = vld [vmem:[%s1] sm:$0xff]
        %v214 = vld [vmem:[%s1 + $0x8] sm:$0xff]
        %v215 = vld [vmem:[%s1 + $0x10] sm:$0xff]
        %v216 = vld [vmem:[%s1 + $0x18] sm:$0xff]
        %v217 = vld [vmem:[%s1 + $0x20] sm:$0xff]
        %v218 = vld [vmem:[%s1 + $0x28] sm:$0xff]
        %v219 = vld [vmem:[%s1 + $0x30] sm:$0xff]
        %v220 = vld [vmem:[%s1 + $0x38] sm:$0xff]
        %v229 = vlaneseq
        %v230 = vand.u32 %v229, 127
        %v231 = vlaneseq
        %v232 = vshrl.u32 %v231, 7
        %v233 = vsub.s32 %v230, %v232
        %v234 = vrot.slane %v198, %v233
        %v235 = vadd.s32 %v230, 4294967288
        %v236 = vlaneseq
        %v237 = vshrl.u32 %v236, 7
        %v238 = vsub.s32 %v235, %v237
        %v239 = vrot.slane %v200, %v238
        %vm240 = vcmask 130112
        %v241 = vsel %vm240, %v239, %v234
        %v242 = vadd.s32 %v230, 4294967280
        %v243 = vlaneseq
        %v244 = vshrl.u32 %v243, 7
        %v245 = vsub.s32 %v242, %v244
        %v246 = vrot.slane %v202, %v245
        %vm247 = vcmask 195712
        %v248 = vsel %vm247, %v246, %v241
        %v249 = vadd.s32 %v230, 4294967272
        %v250 = vlaneseq
        %v251 = vshrl.u32 %v250, 7
        %v252 = vsub.s32 %v249, %v251
        %v253 = vrot.slane %v204, %v252
        %vm254 = vcmask 261312
        %v255 = vsel %vm254, %v253, %v248
        %v256 = vadd.s32 %v230, 4294967264
        %v257 = vlaneseq
        %v258 = vshrl.u32 %v257, 7
        %v259 = vsub.s32 %v256, %v258
        %v260 = vrot.slane %v206, %v259
        %vm261 = vcmask 326912
        %v262 = vsel %vm261, %v260, %v255
        %v263 = vadd.s32 %v230, 4294967256
        %v264 = vlaneseq
        %v265 = vshrl.u32 %v264, 7
        %v266 = vsub.s32 %v263, %v265
        %v267 = vrot.slane %v208, %v266
        %vm268 = vcmask 392512
        %v269 = vsel %vm268, %v267, %v262
        %v270 = vadd.s32 %v230, 4294967248
        %v271 = vlaneseq
        %v272 = vshrl.u32 %v271, 7
        %v273 = vsub.s32 %v270, %v272
        %v274 = vrot.slane %v210, %v273
        %vm275 = vcmask 458112
        %v276 = vsel %vm275, %v274, %v269
        %v277 = vadd.s32 %v230, 4294967240
        %v278 = vlaneseq
        %v279 = vshrl.u32 %v278, 7
        %v280 = vsub.s32 %v277, %v279
        %v281 = vrot.slane %v212, %v280
        %vm282 = vcmask 523712
        %v283 = vsel %vm282, %v281, %v276
        %vm284 = vcmask 523264
        %v285 = vsel %vm284, %v283, 0
        %287 = vmatprep.subr.mxu0 0.0
        %288 = vmatpush1.msra.mxu0 0.0
        %289 = vmatprep.subr.mxu0 0.0
        %290 = vmatpush1.msra.mxu0 0.0
        %291 = vmatprep.subr.mxu0 0.0
        %292 = vmatpush1.msra.mxu0 0.0
        %293 = vmatprep.subr.mxu0 0.0
        %294 = vmatpush1.msra.mxu0 0.0
        %295 = vmatprep.subr.mxu0 0.0
        %296 = vmatpush1.msra.mxu0 0.0
        %297 = vmatprep.subr.mxu0 0.0
        %298 = vmatpush1.msra.mxu0 0.0
        %299 = vmatprep.subr.mxu0 0.0
        %300 = vmatpush1.msra.mxu0 0.0
        %301 = vmatprep.subr.mxu0 0.0
        %302 = vmatpush1.msra.mxu0 0.0
        %303 = vmatprep.subr.mxu0 0.0
        %304 = vmatpush1.msra.mxu0 %v220
        %305 = vmatprep.subr.mxu0 0.0
        %306 = vmatpush1.msra.mxu0 %v219
        %307 = vmatprep.subr.mxu0 0.0
        %308 = vmatpush1.msra.mxu0 %v218
        %309 = vmatprep.subr.mxu0 0.0
        %310 = vmatpush1.msra.mxu0 %v217
        %311 = vmatprep.subr.mxu0 0.0
        %312 = vmatpush1.msra.mxu0 %v216
        %313 = vmatprep.subr.mxu0 0.0
        %314 = vmatpush1.msra.mxu0 %v215
        %315 = vmatprep.subr.mxu0 0.0
        %316 = vmatpush1.msra.mxu0 %v214
        %317 = vmatprep.subr.mxu0 0.0
        %318 = vmatpush1.msra.mxu0 %v213
        %319 = vmatprep.subr.mxu0 0.0
        %320 = vmatpush2.msra.mxu0 0.0
        %321 = vmatprep.subr.mxu0 0.0
        %322 = vmatpush2.msra.mxu0 0.0
        %323 = vmatprep.subr.mxu0 0.0
        %324 = vmatpush2.msra.mxu0 0.0
        %325 = vmatprep.subr.mxu0 0.0
        %326 = vmatpush2.msra.mxu0 0.0
        %327 = vmatprep.subr.mxu0 0.0
        %328 = vmatpush2.msra.mxu0 0.0
        %329 = vmatprep.subr.mxu0 0.0
        %330 = vmatpush2.msra.mxu0 0.0
        %331 = vmatprep.subr.mxu0 0.0
        %332 = vmatpush2.msra.mxu0 0.0
        %333 = vmatprep.subr.mxu0 0.0
        %334 = vmatpush2.msra.mxu0 0.0
        %335 = vmatprep.subr.mxu0 0.0
        %336 = vmatpush2.msra.mxu0 0.0
        %337 = vmatprep.subr.mxu0 0.0
        %338 = vmatpush2.msra.mxu0 0.0
        %339 = vmatprep.subr.mxu0 0.0
        %340 = vmatpush2.msra.mxu0 0.0
        %341 = vmatprep.subr.mxu0 0.0
        %342 = vmatpush2.msra.mxu0 0.0
        %343 = vmatprep.subr.mxu0 0.0
        %344 = vmatpush2.msra.mxu0 0.0
        %345 = vmatprep.subr.mxu0 0.0
        %346 = vmatpush2.msra.mxu0 0.0
        %347 = vmatprep.subr.mxu0 0.0
        %348 = vmatpush2.msra.mxu0 0.0
        %349 = vmatprep.subr.mxu0 0.0
        %350 = vmatpush2.msra.mxu0 0.0
        %351 = vmatprep.mubr.f32.mxu0 0.0
        %352 = vmatmul.mubr.f32.gmra.mxu0 %v285
        %v353 = vpop.f32.mrf.mxu0
        %v354 = vadd.f32 0.0, %v353
        %v355 = vpop.f32.mrf.mxu0
        %356 = vdwg.mxu0
        %v357 = vmax.f32 %v354, 0.0
        %v358 = vld [vmem:[%s2] sm:$0xf]
        %vm359 = vcmask 31744
        %v361 = vsel %vm359, %v357, 0
        %vm363 = vcmask 1043456
        %v365 = vsel %vm363, %v358, 0
        %367 = vmatprep.subr.mxu0 0.0
        %368 = vmatpush1.msra.mxu0 0.0
        %369 = vmatprep.subr.mxu0 0.0
        %370 = vmatpush1.msra.mxu0 0.0
        %371 = vmatprep.subr.mxu0 0.0
        %372 = vmatpush1.msra.mxu0 0.0
        %373 = vmatprep.subr.mxu0 0.0
        %374 = vmatpush1.msra.mxu0 0.0
        %375 = vmatprep.subr.mxu0 0.0
        %376 = vmatpush1.msra.mxu0 0.0
        %377 = vmatprep.subr.mxu0 0.0
        %378 = vmatpush1.msra.mxu0 0.0
        %379 = vmatprep.subr.mxu0 0.0
        %380 = vmatpush1.msra.mxu0 0.0
        %381 = vmatprep.subr.mxu0 0.0
        %382 = vmatpush1.msra.mxu0 0.0
        %383 = vmatprep.subr.mxu0 0.0
        %384 = vmatpush1.msra.mxu0 0.0
        %385 = vmatprep.subr.mxu0 0.0
        %386 = vmatpush1.msra.mxu0 0.0
        %387 = vmatprep.subr.mxu0 0.0
        %388 = vmatpush1.msra.mxu0 0.0
        %389 = vmatprep.subr.mxu0 0.0
        %390 = vmatpush1.msra.mxu0 0.0
        %391 = vmatprep.subr.mxu0 0.0
        %392 = vmatpush1.msra.mxu0 0.0
        %393 = vmatprep.subr.mxu0 0.0
        %394 = vmatpush1.msra.mxu0 0.0
        %395 = vmatprep.subr.mxu0 0.0
        %396 = vmatpush1.msra.mxu0 0.0
        %397 = vmatprep.subr.mxu0 0.0
        %398 = vmatpush1.msra.mxu0 %v365
        %399 = vmatprep.subr.mxu0 0.0
        %400 = vmatpush2.msra.mxu0 0.0
        %401 = vmatprep.subr.mxu0 0.0
        %402 = vmatpush2.msra.mxu0 0.0
        %403 = vmatprep.subr.mxu0 0.0
        %404 = vmatpush2.msra.mxu0 0.0
        %405 = vmatprep.subr.mxu0 0.0
        %406 = vmatpush2.msra.mxu0 0.0
        %407 = vmatprep.subr.mxu0 0.0
        %408 = vmatpush2.msra.mxu0 0.0
        %409 = vmatprep.subr.mxu0 0.0
        %410 = vmatpush2.msra.mxu0 0.0
        %411 = vmatprep.subr.mxu0 0.0
        %412 = vmatpush2.msra.mxu0 0.0
        %413 = vmatprep.subr.mxu0 0.0
        %414 = vmatpush2.msra.mxu0 0.0
        %415 = vmatprep.subr.mxu0 0.0
        %416 = vmatpush2.msra.mxu0 0.0
        %417 = vmatprep.subr.mxu0 0.0
        %418 = vmatpush2.msra.mxu0 0.0
        %419 = vmatprep.subr.mxu0 0.0
        %420 = vmatpush2.msra.mxu0 0.0
        %421 = vmatprep.subr.mxu0 0.0
        %422 = vmatpush2.msra.mxu0 0.0
        %423 = vmatprep.subr.mxu0 0.0
        %424 = vmatpush2.msra.mxu0 0.0
        %425 = vmatprep.subr.mxu0 0.0
        %426 = vmatpush2.msra.mxu0 0.0
        %427 = vmatprep.subr.mxu0 0.0
        %428 = vmatpush2.msra.mxu0 0.0
        %429 = vmatprep.subr.mxu0 0.0
        %430 = vmatpush2.msra.mxu0 0.0
        %431 = vmatprep.mubr.f32.mxu0 0.0
        %432 = vmatmul.mubr.f32.gmra.mxu0 %v361
        %v433 = vpop.f32.mrf.mxu0
        %v434 = vadd.f32 0.0, %v433
        %v435 = vpop.f32.mrf.mxu0
        %436 = vdwg.mxu0
        %v437 = vxor.u32 %v434, 2147483648
        %v438 = vmul.f32 %v437, 1.442695
        %v439 = vpow.pop %v438
        %v440 = vadd.f32 %v439, 1.0
        %v441 = vrcp.pop %v440
        %v442 = vmul.f32 1.0, %v441
        %v443 = vlaneseq
        %v444 = vshrl.u32 %v443, 7
        %v445 = vsub.s32 0, %v444
        %v446 = vrot.slane %v442, %v445
        %448 = vbcast.lane.b32.xlu0 %v446, 256
        %v449 = vpop.permute.xlu0 %448
        %s451 = sor.u32 256, 8
        %452 = vbcast.lane.b32.xlu0 %v446, %s451
        %v453 = vpop.permute.xlu0 %452
        %s455 = sor.u32 256, 16
        %456 = vbcast.lane.b32.xlu0 %v446, %s455
        %v457 = vpop.permute.xlu0 %456
        %s459 = sor.u32 256, 24
        %460 = vbcast.lane.b32.xlu0 %v446, %s459
        %v461 = vpop.permute.xlu0 %460
        %s463 = sor.u32 256, 32
        %464 = vbcast.lane.b32.xlu0 %v446, %s463
        %v465 = vpop.permute.xlu0 %464
        %s467 = sor.u32 256, 40
        %468 = vbcast.lane.b32.xlu0 %v446, %s467
        %v469 = vpop.permute.xlu0 %468
        %s471 = sor.u32 256, 48
        %472 = vbcast.lane.b32.xlu0 %v446, %s471
        %v473 = vpop.permute.xlu0 %472
        %s475 = sor.u32 256, 56
        %476 = vbcast.lane.b32.xlu0 %v446, %s475
        %v477 = vpop.permute.xlu0 %476
        %v478 = vmul.f32 %v189, %v449
        %v479 = vmul.f32 %v190, %v453
        %v480 = vmul.f32 %v191, %v457
        %v481 = vmul.f32 %v192, %v461
        %v482 = vmul.f32 %v193, %v465
        %v483 = vmul.f32 %v194, %v469
        %v484 = vmul.f32 %v195, %v473
        %v485 = vmul.f32 %v196, %v477
        %486 = vst [vmem:[%s188] sm:$0xff] %v478
        %487 = vst [vmem:[%s188 + $0x8] sm:$0xff] %v479
        %488 = vst [vmem:[%s188 + $0x10] sm:$0xff] %v480
        %489 = vst [vmem:[%s188 + $0x18] sm:$0xff] %v481
        %490 = vst [vmem:[%s188 + $0x20] sm:$0xff] %v482
        %491 = vst [vmem:[%s188 + $0x28] sm:$0xff] %v483
        %492 = vst [vmem:[%s188 + $0x30] sm:$0xff] %v484
        %493 = vst [vmem:[%s188 + $0x38] sm:$0xff] %v485
        %s494 = sand.u32 %s96, 1
        %s495 = scalar_lea.sflag [#allocation4], %s494
        %s496 = sand.u32 %s96, 1
        %s497 = smul.addr %s496, 64
        %s498 = scalar_lea.vmem [#allocation5], %s497
        // Predicated region
        $region37: #{tpu_custom_call.1} parent=31 // pred_check
          %p499 = pneg %p106
        $region38: #{tpu_custom_call.1} parent=31 // pred_check_branch
          %501 = sbr.rel (%p499) target = $region40
        $region39: #{tpu_custom_call.1} parent=31 // pred_region
          %s503 = ssub.s32 1024, 1024
          %504 = vsyncadd %s495, %s503
          %s505 = smul.addr %s20, 8
          %s506 = smul.addr %s505, 128
          %s507 = scalar_lea.hbm %s3, %s506
          %s508 = sshll.u32 %s498, 4
          %s509 = int_to_ptr.vmem [resolvable:$true] %s508
          %514 = dma.vmem_to_hbm [thread:$0]  %s509, 1024, %s507, %s495, 128, 128, 8
        $region40: #{tpu_custom_call.1} parent=31 // pred_fallthru
          _
      $region32: #{tpu_custom_call.1} parent=5 // pred_fallthru
        _
      %p515 = scmp.le.s32.totalorder 2, %s15
      // Predicated region
      $region41: #{tpu_custom_call.1} parent=5 // pred_check
        %p516 = pneg %p515
      $region42: #{tpu_custom_call.1} parent=5 // pred_check_branch
        %518 = sbr.rel (%p516) target = $region44
      $region43: #{tpu_custom_call.1} parent=5 // pred_region
        %s519 = ssub.s32 %s15, 2
        // Predicated region
        $region45: #{tpu_custom_call.1} parent=43 // pred_check
          %p520 = pneg %p112
        $region46: #{tpu_custom_call.1} parent=43 // pred_check_branch
          %522 = sbr.rel (%p520) target = $region48
        $region47: #{tpu_custom_call.1} parent=43 // pred_region
          %s523 = sand.u32 %s97, 1
          %s524 = scalar_lea.sflag [#allocation4], %s523
          %s525 = sand.u32 %s97, 1
          %s526 = smul.addr %s525, 64
          %s527 = scalar_lea.vmem [#allocation5], %s526
          %528 = dma.done %s524, 1024
        $region48: #{tpu_custom_call.1} parent=43 // pred_fallthru
          _
      $region44: #{tpu_custom_call.1} parent=5 // pred_fallthru
        _
    $region6: #{tpu_custom_call.1} parent=1 // loop_footer
      %s19 = sadd.s32 1, %s15
    $region7: #{tpu_custom_call.1} parent=1 // loop_footer_branch
      %14 = sbr.rel target = $region3
    $region8: #{tpu_custom_call.1} parent=1 // loop_exit
      _
    %529 = vsyncpa [#allocation3], 1
    %s530 = scalar_lea.sflag [#allocation3], 1
    %531 = vsyncpa %s530, 1
    %532 = vsyncpa [#allocation4], 1
    %s533 = scalar_lea.sflag [#allocation4], 1
    %534 = vsyncpa %s533, 1

</llo_original>
